<compile_context>
chip_gen: v5e
topology: v5e:2x2
jax: 0.10.0
libtpu: 0.0.40
codegen_flags: <defaults>
</compile_context>

<pallas_src>
import numpy as np

import jax
import jax.numpy as jnp
from jax.experimental import pallas as pl
from jax.experimental.pallas import tpu as pltpu

MATMUL_DTYPE = jnp.bfloat16   # MXU operand dtype; accumulation stays f32
GX_DTYPE = jnp.bfloat16       # storage dtype of the precomputed input gates
LANE = 128


def _round_up(x, m):
    return (x + m - 1) // m * m


# ----------------------------------------------------------------------------
# Kernel 1: fused graph encoder stand-in + hoisted LSTM input projection
#   gx = tanh(x_cls @ W_g + b_g) @ W_ih + (b_ih + b_hh)        [tm, 4*Dp] bf16
# ----------------------------------------------------------------------------
def graph_gates_kernel(x_ref, wg_ref, bg_ref, wih_ref, bl_ref, gx_ref):
    # graph_encoder stand-in (linear + tanh on node-0 features)
    e = jnp.tanh(
        jnp.dot(x_ref[...].astype(wg_ref.dtype), wg_ref[...],
                preferred_element_type=jnp.float32)
        + bg_ref[...]
    )
    # hoisted LSTM input projection: one batched MXU matmul over all graphs
    gx = (
        jnp.dot(e.astype(wih_ref.dtype), wih_ref[...],
                preferred_element_type=jnp.float32)
        + bl_ref[...]
    )
    gx_ref[...] = gx.astype(gx_ref.dtype)


def graph_input_gates(x_cls_padded, w_g, b_g, w_ih, b_lstm, *, tm):
    """x_cls_padded: [N_pad, F_in] f32 -> per-graph LSTM input gates [N_pad, 4*Dp] bf16."""
    n_pad, f_in = x_cls_padded.shape
    dp = w_g.shape[1]
    g4 = w_ih.shape[1]
    return pl.pallas_call(
        graph_gates_kernel,
        out_shape=jax.ShapeDtypeStruct((n_pad, g4), GX_DTYPE),
        grid=(n_pad // tm,),
        in_specs=[
            pl.BlockSpec((tm, f_in), lambda i: (i, 0)),
            pl.BlockSpec((f_in, dp), lambda i: (0, 0)),
            pl.BlockSpec((1, dp), lambda i: (0, 0)),
            pl.BlockSpec((dp, g4), lambda i: (0, 0)),
            pl.BlockSpec((1, g4), lambda i: (0, 0)),
        ],
        out_specs=pl.BlockSpec((tm, g4), lambda i: (i, 0)),
        compiler_params=pltpu.CompilerParams(
            dimension_semantics=("parallel",)),
    )(x_cls_padded, w_g, b_g, w_ih, b_lstm)


# ----------------------------------------------------------------------------
# Kernel 2: length-masked single-layer LSTM recurrence (packed-sequence equivalent)
#   grid = (batch_blocks "parallel", time_blocks "arbitrary")
#   * TT timesteps per grid step (inner unrolled loop) -> amortized grid overhead
#   * gate rows streamed straight from HBM with manual double-buffered DMAs
#     (per batch row the TT-step slab is contiguous: rows starts[b]+t)
#   * h lives in the resident output block, c in VMEM scratch
# ----------------------------------------------------------------------------
def lstm_scan_kernel(starts_ref, lens_ref, gx_hbm, whh_ref, h_ref,
                     gbuf, dsem, c_ref):
    ib = pl.program_id(0)                 # batch block
    tb = pl.program_id(1)                 # time block
    n_tblocks = pl.num_programs(1)
    tb_batch, dp = h_ref.shape
    tt = gbuf.shape[2]
    n_rows = gx_hbm.shape[0]

    def fetch(block, slot):
        # DMA each batch row's contiguous TT-step gate slab from HBM.
        for bb in range(tb_batch):
            start = starts_ref[ib * tb_batch + bb] + block * tt
            # clamp only ever triggers for fully-masked slabs (kept in bounds by
            # the >=TT slack rows padded onto gx in the wrapper)
            start = jnp.minimum(start, n_rows - tt)
            pltpu.make_async_copy(
                gx_hbm.at[pl.ds(start, tt), :],
                gbuf.at[slot, bb],
                dsem.at[slot, bb],
            ).start()

    @pl.when(tb == 0)
    def _():
        h_ref[...] = jnp.zeros_like(h_ref)
        c_ref[...] = jnp.zeros_like(c_ref)
        fetch(0, 0)

    @pl.when(tb + 1 < n_tblocks)
    def _():
        fetch(tb + 1, (tb + 1) % 2)       # prefetch next time block (other slot)

    slot = tb % 2
    for bb in range(tb_batch):            # wait for current block's slabs
        pltpu.make_async_copy(
            gx_hbm.at[pl.ds(0, tt), :], gbuf.at[slot, bb], dsem.at[slot, bb]
        ).wait()

    gx_blk = gbuf[slot]                   # [TB, TT, 4*Dp] bf16
    whh = whh_ref[...]                    # bf16, resident
    h = h_ref[...]
    c = c_ref[...]

    for step in range(tt):                # short, fixed trip count -> unrolled
        t_abs = tb * tt + step
        # recurrent path: one [TB, Dp] x [Dp, 4Dp] matmul + precomputed input gates
        gates = (gx_blk[:, step, :].astype(jnp.float32)
                 + jnp.dot(h.astype(whh.dtype), whh,
                           preferred_element_type=jnp.float32))
        # lane-aligned gate slices (Dp multiple of 128); PyTorch order i, f, g, o
        i_g = jax.nn.sigmoid(gates[:, 0 * dp:1 * dp])
        f_g = jax.nn.sigmoid(gates[:, 1 * dp:2 * dp])
        g_g = jnp.tanh(gates[:, 2 * dp:3 * dp])
        o_g = jax.nn.sigmoid(gates[:, 3 * dp:4 * dp])
        c_new = f_g * c + i_g * g_g
        h_new = o_g * jnp.tanh(c_new)
        valid = lens_ref[...] > t_abs     # [TB, 1]; pack_padded_sequence equivalent
        h = jnp.where(valid, h_new, h)
        c = jnp.where(valid, c_new, c)

    h_ref[...] = h
    c_ref[...] = c


def lstm_last_hidden(gx_rows, starts, lens_col, w_hh, *, n_tblocks, tt, tb_batch):
    """gx_rows: [N_pad, 4*Dp] bf16 (HBM); starts/lens: [Bp] / [Bp,1] int32."""
    bp = lens_col.shape[0]
    dp4 = w_hh.shape[1]
    dp = dp4 // 4
    return pl.pallas_call(
        lstm_scan_kernel,
        out_shape=jax.ShapeDtypeStruct((bp, dp), jnp.float32),
        grid_spec=pltpu.PrefetchScalarGridSpec(
            num_scalar_prefetch=1,                      # starts -> SMEM
            grid=(bp // tb_batch, n_tblocks),
            in_specs=[
                pl.BlockSpec((tb_batch, 1), lambda i, t, starts: (i, 0)),   # lens
                pl.BlockSpec(memory_space=pl.ANY),                          # gx (HBM)
                pl.BlockSpec((dp, dp4), lambda i, t, starts: (0, 0)),       # W_hh
            ],
            out_specs=pl.BlockSpec((tb_batch, dp), lambda i, t, starts: (i, 0)),
            scratch_shapes=[
                pltpu.VMEM((2, tb_batch, tt, dp4), GX_DTYPE),   # gate stream buf
                pltpu.SemaphoreType.DMA((2, tb_batch)),         # per-slab DMA sems
                pltpu.VMEM((tb_batch, dp), jnp.float32),        # c carry
            ],
        ),
        compiler_params=pltpu.CompilerParams(
            dimension_semantics=("parallel", "arbitrary")),
    )(starts, lens_col, gx_rows, w_hh)


# ----------------------------------------------------------------------------
# Parameter packing: PyTorch layout -> lane-padded kernel layout (exact semantics:
# padded columns/rows are zero, so padded h/c columns stay exactly 0)
# ----------------------------------------------------------------------------
def pack_params(raw, d):
    dp = _round_up(d, LANE)
    f_in = raw["w_g"].shape[0]

    w_g = jnp.zeros((f_in, dp), jnp.float32).at[:, :d].set(raw["w_g"])
    b_g = jnp.zeros((1, dp), jnp.float32).at[:, :d].set(raw["b_g"])

    # PyTorch LSTM weights [4d, d] with row blocks (i, f, g, o) -> transposed [d, 4d]
    w_ih_t = raw["w_ih"].T
    w_hh_t = raw["w_hh"].T
    bias = raw["b_ih"] + raw["b_hh"]

    w_ih = jnp.zeros((dp, 4 * dp), jnp.float32)
    w_hh = jnp.zeros((dp, 4 * dp), jnp.float32)
    b_l = jnp.zeros((1, 4 * dp), jnp.float32)
    for k in range(4):
        w_ih = w_ih.at[:d, k * dp:k * dp + d].set(w_ih_t[:, k * d:(k + 1) * d])
        w_hh = w_hh.at[:d, k * dp:k * dp + d].set(w_hh_t[:, k * d:(k + 1) * d])
        b_l = b_l.at[:, k * dp:k * dp + d].set(bias[k * d:(k + 1) * d])

    return {
        "w_g": w_g.astype(MATMUL_DTYPE),
        "b_g": b_g,
        "w_ih": w_ih.astype(MATMUL_DTYPE),
        "w_hh": w_hh.astype(MATMUL_DTYPE),
        "b_lstm": b_l,
        "d": d,
        "dp": dp,
    }


# ----------------------------------------------------------------------------
# Path_encoder forward
# ----------------------------------------------------------------------------
def path_encoder_forward(graphs, context_lens, params, *, tm=512, tt=8):
    """graphs: [N_total, n_nodes, F_in] f32; context_lens: Python list of ints (>=1)."""
    batch = len(context_lens)
    max_len = int(max(context_lens))
    d = params["d"]
    n = graphs.shape[0]

    # graph_encoder(graphs)[:, 0, :]
    x_cls = graphs[:, 0, :]                                       # [N, F_in]

    # Row padding: at least `tt` slack rows so every TT-step DMA slab that contains a
    # valid timestep stays in bounds (fully-masked slabs are clamped in-kernel).
    tm = min(tm, _round_up(n, 8))
    n_pad = _round_up(n + tt, tm)
    x_cls = jnp.pad(x_cls, ((0, n_pad - n), (0, 0)))

    gx_rows = graph_input_gates(
        x_cls, params["w_g"], params["b_g"], params["w_ih"], params["b_lstm"], tm=tm
    )                                                             # [N_pad, 4*Dp] bf16

    # Batch padded to full sublanes; padded rows get len = 0 (always masked, h stays 0).
    bp = _round_up(batch, 8)
    lens_np = np.zeros((bp,), np.int32)
    lens_np[:batch] = np.asarray(context_lens, np.int32)
    starts_np = np.zeros((bp,), np.int32)
    starts_np[:batch] = np.cumsum([0] + list(context_lens[:-1])).astype(np.int32)

    n_tblocks = -(-max_len // tt)
    h_n = lstm_last_hidden(
        gx_rows,
        jnp.asarray(starts_np),
        jnp.asarray(lens_np).reshape(bp, 1),
        params["w_hh"],
        n_tblocks=n_tblocks, tt=tt, tb_batch=min(bp, 8),
    )                                                             # [Bp, Dp]

    # h_n.transpose(1,0).view(B, -1) with num_layers == 1 -> [B, D]; drop padding.
    return h_n[:batch, :d]


# ----------------------------------------------------------------------------
# Pure-JAX reference (same bf16 weights; f32 math) for a loose numeric check
# ----------------------------------------------------------------------------
def reference_forward(graphs, context_lens, params):
    d, dp = params["d"], params["dp"]
    x = graphs[:, 0, :]
    e = jnp.tanh(x @ params["w_g"].astype(jnp.float32) + params["b_g"])
    gx = e @ params["w_ih"].astype(jnp.float32) + params["b_lstm"]
    whh = params["w_hh"].astype(jnp.float32)
    outs, off = [], 0
    for l in context_lens:
        h = jnp.zeros((dp,), jnp.float32)
        c = jnp.zeros((dp,), jnp.float32)
        for t in range(l):
            g = gx[off + t] + h @ whh
            i_g = jax.nn.sigmoid(g[0 * dp:1 * dp])
            f_g = jax.nn.sigmoid(g[1 * dp:2 * dp])
            g_g = jnp.tanh(g[2 * dp:3 * dp])
            o_g = jax.nn.sigmoid(g[3 * dp:4 * dp])
            c = f_g * c + i_g * g_g
            h = o_g * jnp.tanh(c)
        outs.append(h[:d])
        off += l
    return jnp.stack(outs)


# ----------------------------------------------------------------------------
# main
# ----------------------------------------------------------------------------
if __name__ == "__main__":
    key = jax.random.PRNGKey(0)
    ks = jax.random.split(key, 7)

    # small, module-consistent shapes
    context_lens = [3, 5]          # batch = 2
    n_total = sum(context_lens)    # 8 graphs in the flattened batch
    n_nodes = 6
    f_in = 16
    d = 32                         # lstm input_size == hidden_size (forced by init_hidden)

    graphs = jax.random.normal(ks[0], (n_total, n_nodes, f_in), jnp.float32)

    raw_params = {
        # graph_encoder stand-in
        "w_g": jax.random.normal(ks[1], (f_in, d), jnp.float32) * 0.1,
        "b_g": jax.random.normal(ks[2], (d,), jnp.float32) * 0.1,
        # PyTorch LSTM layout: W_ih [4D, D], W_hh [4D, D], b_ih / b_hh [4D]
        "w_ih": jax.random.normal(ks[3], (4 * d, d), jnp.float32) * 0.1,
        "w_hh": jax.random.normal(ks[4], (4 * d, d), jnp.float32) * 0.1,
        "b_ih": jax.random.normal(ks[5], (4 * d,), jnp.float32) * 0.1,
        "b_hh": jax.random.normal(ks[6], (4 * d,), jnp.float32) * 0.1,
    }
    params = pack_params(raw_params, d)

    enc = path_encoder_forward(graphs, context_lens, params)
    enc = jax.block_until_ready(enc)
    assert enc.shape == (len(context_lens), d), enc.shape

    # loose tolerance: deliberate bf16 gate storage / bf16 MXU operands
    ref = jax.block_until_ready(reference_forward(graphs, context_lens, params))
    np.testing.assert_allclose(np.asarray(enc), np.asarray(ref), rtol=5e-2, atol=5e-2)

    print("KERNEL_OK")
</pallas_src>

<mosaic_0001>
module attributes {stable_mosaic.version = 11 : i64} {
  func.func @graph_gates_kernel(%arg0: i32, %arg1: memref<8x16xf32, #tpu.memory_space<vmem>>, %arg2: memref<16x128xbf16, #tpu.memory_space<vmem>>, %arg3: memref<1x128xf32, #tpu.memory_space<vmem>>, %arg4: memref<128x512xbf16, #tpu.memory_space<vmem>>, %arg5: memref<1x512xf32, #tpu.memory_space<vmem>>, %arg6: memref<8x512xbf16, #tpu.memory_space<vmem>>) attributes {dimension_semantics = [#tpu.dimension_semantics<parallel>], iteration_bounds = array<i64: 2>, scalar_prefetch = 0 : i64, scratch_operands = 0 : i64, tpu.core_type = #tpu.core_type<tc>, window_params = [{transform_indices = @transform_0, window_bounds = array<i64: 8, 16>}, {pipeline_mode = #tpu.pipeline_mode<synchronous>, transform_indices = @transform_1, window_bounds = array<i64: 16, 128>}, {pipeline_mode = #tpu.pipeline_mode<synchronous>, transform_indices = @transform_2, window_bounds = array<i64: 1, 128>}, {pipeline_mode = #tpu.pipeline_mode<synchronous>, transform_indices = @transform_3, window_bounds = array<i64: 128, 512>}, {pipeline_mode = #tpu.pipeline_mode<synchronous>, transform_indices = @transform_4, window_bounds = array<i64: 1, 512>}, {transform_indices = @transform_5, window_bounds = array<i64: 8, 512>}]} {
    %c0 = arith.constant 0 : index
    %c0_0 = arith.constant 0 : index
    %0 = vector.load %arg1[%c0, %c0_0] : memref<8x16xf32, #tpu.memory_space<vmem>>, vector<8x16xf32>
    %1 = arith.truncf %0 : vector<8x16xf32> to vector<8x16xbf16>
    %c0_1 = arith.constant 0 : index
    %c0_2 = arith.constant 0 : index
    %2 = vector.load %arg2[%c0_1, %c0_2] : memref<16x128xbf16, #tpu.memory_space<vmem>>, vector<16x128xbf16>
    %cst = arith.constant dense<0.000000e+00> : vector<8x128xf32>
    %3 = tpu.matmul %1, %2, %cst {dimension_numbers = #tpu.dot_dimension_numbers<[1], [0], [0], [1], [0, 0, 1, 1], [], []>} : vector<8x16xbf16>, vector<16x128xbf16>, vector<8x128xf32> -> vector<8x128xf32>
    %c0_3 = arith.constant 0 : index
    %c0_4 = arith.constant 0 : index
    %4 = vector.load %arg3[%c0_3, %c0_4] : memref<1x128xf32, #tpu.memory_space<vmem>>, vector<1x128xf32>
    %5 = vector.broadcast %4 : vector<1x128xf32> to vector<8x128xf32>
    %6 = arith.addf %3, %5 : vector<8x128xf32>
    %7 = math.tanh %6 : vector<8x128xf32>
    %8 = arith.truncf %7 : vector<8x128xf32> to vector<8x128xbf16>
    %c0_5 = arith.constant 0 : index
    %c0_6 = arith.constant 0 : index
    %9 = vector.load %arg4[%c0_5, %c0_6] : memref<128x512xbf16, #tpu.memory_space<vmem>>, vector<128x512xbf16>
    %cst_7 = arith.constant dense<0.000000e+00> : vector<8x512xf32>
    %10 = tpu.matmul %8, %9, %cst_7 {dimension_numbers = #tpu.dot_dimension_numbers<[1], [0], [0], [1], [0, 0, 1, 1], [], []>} : vector<8x128xbf16>, vector<128x512xbf16>, vector<8x512xf32> -> vector<8x512xf32>
    %c0_8 = arith.constant 0 : index
    %c0_9 = arith.constant 0 : index
    %11 = vector.load %arg5[%c0_8, %c0_9] : memref<1x512xf32, #tpu.memory_space<vmem>>, vector<1x512xf32>
    %12 = vector.broadcast %11 : vector<1x512xf32> to vector<8x512xf32>
    %13 = arith.addf %10, %12 : vector<8x512xf32>
    %14 = arith.truncf %13 : vector<8x512xf32> to vector<8x512xbf16>
    %c0_10 = arith.constant 0 : index
    %c0_11 = arith.constant 0 : index
    %15 = vector.load %arg6[%c0_10, %c0_11] : memref<8x512xbf16, #tpu.memory_space<vmem>>, vector<8x512xbf16>
    tpu.vector_store %arg6[%c0_10, %c0_11], %14 {strides = array<i32>} : memref<8x512xbf16, #tpu.memory_space<vmem>>, vector<8x512xbf16>,
    return
  }
  func.func @transform_0(%arg0: i32) -> (i32, i32) {
    %c0_i32 = arith.constant 0 : i32
    %c0_i32_0 = arith.constant 0 : i32
    return %arg0, %c0_i32 : i32, i32
  }
  func.func @transform_1(%arg0: i32) -> (i32, i32) {
    %c0_i32 = arith.constant 0 : i32
    %c0_i32_0 = arith.constant 0 : i32
    %c0_i32_1 = arith.constant 0 : i32
    return %c0_i32, %c0_i32_0 : i32, i32
  }
  func.func @transform_2(%arg0: i32) -> (i32, i32) {
    %c0_i32 = arith.constant 0 : i32
    %c0_i32_0 = arith.constant 0 : i32
    %c0_i32_1 = arith.constant 0 : i32
    return %c0_i32, %c0_i32_0 : i32, i32
  }
  func.func @transform_3(%arg0: i32) -> (i32, i32) {
    %c0_i32 = arith.constant 0 : i32
    %c0_i32_0 = arith.constant 0 : i32
    %c0_i32_1 = arith.constant 0 : i32
    return %c0_i32, %c0_i32_0 : i32, i32
  }
  func.func @transform_4(%arg0: i32) -> (i32, i32) {
    %c0_i32 = arith.constant 0 : i32
    %c0_i32_0 = arith.constant 0 : i32
    %c0_i32_1 = arith.constant 0 : i32
    return %c0_i32, %c0_i32_0 : i32, i32
  }
  func.func @transform_5(%arg0: i32) -> (i32, i32) {
    %c0_i32 = arith.constant 0 : i32
    %c0_i32_0 = arith.constant 0 : i32
    return %arg0, %c0_i32 : i32, i32
  }
}

</mosaic_0001>

<llo_original>
// kernel: tpu_custom_call.1
$region0: #{tpu_custom_call.1}
  #allocation0 [shape = 'u32[]', space=smem, size = 0x4, offset = 0x4, fixed_abs, tag = 'smem constant byte address 0x4 - core index']
  #allocation1 [shape = 'u32[72,128]{1,0:T(1,128)}', space=vmem, size = 0x9000, scoped, tag = 'internal scratch']
  %s0 = inlined_call_operand.hbm [shape: f32[16,16], index: 0, kind: input, shape index: {}]
  %s1 = inlined_call_operand.hbm [shape: bf16[16,128], index: 1, kind: input, shape index: {}]
  %s2 = inlined_call_operand.vmem [shape: f32[1,128], index: 2, kind: input, shape index: {}]
  %s3 = inlined_call_operand.hbm [shape: bf16[128,512], index: 3, kind: input, shape index: {}]
  %s4 = inlined_call_operand.hbm [shape: f32[1,512], index: 4, kind: input, shape index: {}]
  %s5 = inlined_call_operand.hbm [shape: bf16[16,512], index: 5, kind: output, shape index: {}]
  %s6 = sld [smem:[#allocation0]]
  $region69: #{tpu_custom_call.1} parent=0
    _
  %s8 = ssub.s32 1, %s6
  %s9 = scalar_select 0, %s8, %s6
  $region1: #{tpu_custom_call.1} parent=0
    #allocation2 [shape = 'u8[8192]{0}', space=vmem, size = 0x2000, scoped, tag = 'input window, operand 0']
    #allocation3 [shape = 's32[2]{0}', space=sflag, size = 0x8, scoped, tag = 'scoped memory for tpu_custom_call.1']
    #allocation4 [shape = 's32[2]{0}', space=sflag, size = 0x8, scoped, tag = 'scoped memory for tpu_custom_call.1']
    #allocation5 [shape = 'u8[4096]{0}', space=vmem, size = 0x1000, scoped, tag = 'input window, operand 1, single buffered']
    #allocation6 [shape = 's32[1]{0}', space=sflag, size = 0x4, scoped, tag = 'scoped memory for tpu_custom_call.1']
    #allocation7 [shape = 'u8[131072]{0}', space=vmem, size = 0x20000, scoped, tag = 'input window, operand 3, single buffered']
    #allocation8 [shape = 'u8[2048]{0}', space=vmem, size = 0x800, scoped, tag = 'input window, operand 4, single buffered']
    #allocation9 [shape = 's32[1]{0}', space=sflag, size = 0x4, scoped, tag = 'scoped memory for tpu_custom_call.1']
    #allocation10 [shape = 'u8[16384]{0}', space=vmem, size = 0x4000, scoped, tag = 'output window, operand 0']
    %10 = vsyncpa [#allocation3], 0
    %s11 = scalar_lea.sflag [#allocation3], 1
    %12 = vsyncpa %s11, 0
    %13 = vsyncpa [#allocation6], 0
    %14 = vsyncpa [#allocation9], 0
    %15 = vsyncpa [#allocation4], 0
    %s16 = scalar_lea.sflag [#allocation4], 1
    %17 = vsyncpa %s16, 0
    loop: start=0, step=1, limit=4
    $region2: #{tpu_custom_call.1} parent=1 // loop_pre_header
      _
    $region3: #{tpu_custom_call.1} parent=1 // loop_header
      %s19 = sphi 0, %s23
      %p20 = scmp.ge.s32.totalorder %s19, 4
      %s29 = sphi 0, %s31
      %s32 = sphi 0, %s29
      %s33 = sphi 0, %s32
      %s49 = sphi 0, %s33
      %s53 = sphi 0, %s53
      %s55 = sphi 0, %s53
      %s56 = sphi 0, %s55
      %s70 = sphi 0, %s56
      %s74 = sphi 0, %s74
      %s76 = sphi 0, %s74
      %s77 = sphi 0, %s76
      %s91 = sphi 0, %s77
      %s95 = sphi 0, %s95
      %s97 = sphi 0, %s95
      %s98 = sphi 0, %s97
      %s112 = sphi 0, %s98
      %s116 = sphi 0, %s116
      %s118 = sphi 0, %s116
      %s119 = sphi 0, %s118
      %s133 = sphi 0, %s119
      %s139 = sphi 0, %s141
      %s142 = sphi 0, %s139
      %s143 = sphi 0, %s142
      %s159 = sphi 0, %s143
    $region4: #{tpu_custom_call.1} parent=1 // loop_header_branch
      %22 = sbr.rel (%p20) target = $region8
    $region5: #{tpu_custom_call.1} parent=1 // loop_body
      %s24 = ssub.s32 %s19, 1
      %s25 = ssub.s32 %s19, 2
      %s26 = sadd.s32 %s19, 1
      %s27 = ssub.s32 %s19, %s26
      %p28 = scmp.eq.s32.totalorder %s27, 0
      %s30 = sadd.s32 %s29, 1
      %s31 = scalar_select %p28, %s29, %s30
      %p34 = pneg %p28
      %p35 = scmp.eq.s32.totalorder %s19, 1
      %p36 = por %p34, %p35
      %p37 = scmp.ne.s32.totalorder %s29, %s32
      %p38 = scmp.eq.s32.totalorder %s19, 0
      %p39 = por %p37, %p38
      %p40 = scmp.ne.s32.totalorder %s29, %s32
      %p41 = scmp.eq.s32.totalorder %s24, 1
      %p42 = por %p40, %p41
      %p43 = scmp.ne.s32.totalorder %s32, %s33
      %p44 = scmp.eq.s32.totalorder %s24, 0
      %p45 = por %p43, %p44
      %p46 = scmp.ne.s32.totalorder %s32, %s33
      %p47 = scmp.eq.s32.totalorder %s25, 1
      %p48 = por %p46, %p47
      %p50 = scmp.ne.s32.totalorder %s33, %s49
      %p51 = scmp.eq.s32.totalorder %s25, 0
      %p52 = por %p50, %p51
      %s54 = sadd.s32 %s53, 1
      %p57 = scmp.eq.s32.totalorder %s19, 1
      %p58 = scmp.ne.s32.totalorder %s53, %s55
      %p59 = scmp.eq.s32.totalorder %s19, 0
      %p60 = por %p58, %p59
      %p61 = scmp.ne.s32.totalorder %s53, %s55
      %p62 = scmp.eq.s32.totalorder %s24, 1
      %p63 = por %p61, %p62
      %p64 = scmp.ne.s32.totalorder %s55, %s56
      %p65 = scmp.eq.s32.totalorder %s24, 0
      %p66 = por %p64, %p65
      %p67 = scmp.ne.s32.totalorder %s55, %s56
      %p68 = scmp.eq.s32.totalorder %s25, 1
      %p69 = por %p67, %p68
      %p71 = scmp.ne.s32.totalorder %s56, %s70
      %p72 = scmp.eq.s32.totalorder %s25, 0
      %p73 = por %p71, %p72
      %s75 = sadd.s32 %s74, 1
      %p78 = scmp.eq.s32.totalorder %s19, 1
      %p79 = scmp.ne.s32.totalorder %s74, %s76
      %p80 = scmp.eq.s32.totalorder %s19, 0
      %p81 = por %p79, %p80
      %p82 = scmp.ne.s32.totalorder %s74, %s76
      %p83 = scmp.eq.s32.totalorder %s24, 1
      %p84 = por %p82, %p83
      %p85 = scmp.ne.s32.totalorder %s76, %s77
      %p86 = scmp.eq.s32.totalorder %s24, 0
      %p87 = por %p85, %p86
      %p88 = scmp.ne.s32.totalorder %s76, %s77
      %p89 = scmp.eq.s32.totalorder %s25, 1
      %p90 = por %p88, %p89
      %p92 = scmp.ne.s32.totalorder %s77, %s91
      %p93 = scmp.eq.s32.totalorder %s25, 0
      %p94 = por %p92, %p93
      %s96 = sadd.s32 %s95, 1
      %p99 = scmp.eq.s32.totalorder %s19, 1
      %p100 = scmp.ne.s32.totalorder %s95, %s97
      %p101 = scmp.eq.s32.totalorder %s19, 0
      %p102 = por %p100, %p101
      %p103 = scmp.ne.s32.totalorder %s95, %s97
      %p104 = scmp.eq.s32.totalorder %s24, 1
      %p105 = por %p103, %p104
      %p106 = scmp.ne.s32.totalorder %s97, %s98
      %p107 = scmp.eq.s32.totalorder %s24, 0
      %p108 = por %p106, %p107
      %p109 = scmp.ne.s32.totalorder %s97, %s98
      %p110 = scmp.eq.s32.totalorder %s25, 1
      %p111 = por %p109, %p110
      %p113 = scmp.ne.s32.totalorder %s98, %s112
      %p114 = scmp.eq.s32.totalorder %s25, 0
      %p115 = por %p113, %p114
      %s117 = sadd.s32 %s116, 1
      %p120 = scmp.eq.s32.totalorder %s19, 1
      %p121 = scmp.ne.s32.totalorder %s116, %s118
      %p122 = scmp.eq.s32.totalorder %s19, 0
      %p123 = por %p121, %p122
      %p124 = scmp.ne.s32.totalorder %s116, %s118
      %p125 = scmp.eq.s32.totalorder %s24, 1
      %p126 = por %p124, %p125
      %p127 = scmp.ne.s32.totalorder %s118, %s119
      %p128 = scmp.eq.s32.totalorder %s24, 0
      %p129 = por %p127, %p128
      %p130 = scmp.ne.s32.totalorder %s118, %s119
      %p131 = scmp.eq.s32.totalorder %s25, 1
      %p132 = por %p130, %p131
      %p134 = scmp.ne.s32.totalorder %s119, %s133
      %p135 = scmp.eq.s32.totalorder %s25, 0
      %p136 = por %p134, %p135
      %s137 = ssub.s32 %s19, %s26
      %p138 = scmp.eq.s32.totalorder %s137, 0
      %s140 = sadd.s32 %s139, 1
      %s141 = scalar_select %p138, %s139, %s140
      %p144 = pneg %p138
      %p145 = scmp.eq.s32.totalorder %s19, 1
      %p146 = por %p144, %p145
      %p147 = scmp.ne.s32.totalorder %s139, %s142
      %p148 = scmp.eq.s32.totalorder %s19, 0
      %p149 = por %p147, %p148
      %p150 = scmp.ne.s32.totalorder %s139, %s142
      %p151 = scmp.eq.s32.totalorder %s24, 1
      %p152 = por %p150, %p151
      %p153 = scmp.ne.s32.totalorder %s142, %s143
      %p154 = scmp.eq.s32.totalorder %s24, 0
      %p155 = por %p153, %p154
      %p156 = scmp.ne.s32.totalorder %s142, %s143
      %p157 = scmp.eq.s32.totalorder %s25, 1
      %p158 = por %p156, %p157
      %p160 = scmp.ne.s32.totalorder %s143, %s159
      %p161 = scmp.eq.s32.totalorder %s25, 0
      %p162 = por %p160, %p161
      %p163 = scmp.le.s32.totalorder 1, %s19
      %p164 = scmp.lt.s32.totalorder %s19, 3
      %p165 = pnand %p163, %p164
      %p166 = pneg %p165
      // Predicated region
      $region9: #{tpu_custom_call.1} parent=5 // pred_check
        _
      $region10: #{tpu_custom_call.1} parent=5 // pred_check_branch
        %168 = sbr.rel (%p165) target = $region12
      $region11: #{tpu_custom_call.1} parent=5 // pred_region
        %s169 = ssub.s32 %s19, 1
        // Predicated region
        $region13: #{tpu_custom_call.1} parent=11 // pred_check
          %p170 = pneg %p66
        $region14: #{tpu_custom_call.1} parent=11 // pred_check_branch
          %172 = sbr.rel (%p170) target = $region16
        $region15: #{tpu_custom_call.1} parent=11 // pred_region
          %174 = vsyncadd [#allocation6], 0
          %s175 = sshll.u32 %s1, 4
          %s176 = int_to_ptr.hbm [resolvable:$true] %s175
          %s177 = sshll.u32 [#allocation5], 4
          %s178 = int_to_ptr.vmem [resolvable:$true] %s177
          %183 = dma.hbm_to_vmem [thread:$0]  %s176, 128, %s178, [#allocation6], 64, 64, 4
        $region16: #{tpu_custom_call.1} parent=11 // pred_fallthru
          _
        // Predicated region
        $region17: #{tpu_custom_call.1} parent=11 // pred_check
          %p184 = pneg %p87
        $region18: #{tpu_custom_call.1} parent=11 // pred_check_branch
          %186 = sbr.rel (%p184) target = $region20
        $region19: #{tpu_custom_call.1} parent=11 // pred_region
          _
        $region20: #{tpu_custom_call.1} parent=11 // pred_fallthru
          _
        // Predicated region
        $region21: #{tpu_custom_call.1} parent=11 // pred_check
          %p187 = pneg %p108
        $region22: #{tpu_custom_call.1} parent=11 // pred_check_branch
          %189 = sbr.rel (%p187) target = $region24
        $region23: #{tpu_custom_call.1} parent=11 // pred_region
          %191 = vsyncadd [#allocation6], 0
          %s192 = sshll.u32 %s3, 4
          %s193 = int_to_ptr.hbm [resolvable:$true] %s192
          %s194 = sshll.u32 [#allocation7], 4
          %s195 = int_to_ptr.vmem [resolvable:$true] %s194
          %200 = dma.hbm_to_vmem [thread:$0]  %s193, 4096, %s195, [#allocation6], 256, 256, 16
        $region24: #{tpu_custom_call.1} parent=11 // pred_fallthru
          _
        // Predicated region
        $region25: #{tpu_custom_call.1} parent=11 // pred_check
          %p201 = pneg %p129
        $region26: #{tpu_custom_call.1} parent=11 // pred_check_branch
          %203 = sbr.rel (%p201) target = $region28
        $region27: #{tpu_custom_call.1} parent=11 // pred_region
          %205 = vsyncadd [#allocation9], 0
          %s207 = sshll.u32 %s4, 4
          %s208 = int_to_ptr.hbm [resolvable:$true] %s207
          %s209 = sshll.u32 [#allocation8], 4
          %s210 = int_to_ptr.vmem [resolvable:$true] %s209
          %212 = dma.hbm_to_vmem [thread:$0]  %s208, 64, %s210, [#allocation9]
        $region28: #{tpu_custom_call.1} parent=11 // pred_fallthru
          _
      $region12: #{tpu_custom_call.1} parent=5 // pred_fallthru
        _
      %p213 = scmp.lt.s32.totalorder %s19, 2
      // Predicated region
      $region29: #{tpu_custom_call.1} parent=5 // pred_check
        %p214 = pneg %p213
      $region30: #{tpu_custom_call.1} parent=5 // pred_check_branch
        %216 = sbr.rel (%p214) target = $region32
      $region31: #{tpu_custom_call.1} parent=5 // pred_region
        // Predicated region
        $region33: #{tpu_custom_call.1} parent=31 // pred_check
          %p217 = pneg %p39
        $region34: #{tpu_custom_call.1} parent=31 // pred_check_branch
          %219 = sbr.rel (%p217) target = $region36
        $region35: #{tpu_custom_call.1} parent=31 // pred_region
          %s220 = sand.u32 %s29, 1
          %s221 = scalar_lea.sflag [#allocation3], %s220
          %s222 = sand.u32 %s29, 1
          %s223 = smul.addr %s222, 8
          %s224 = scalar_lea.vmem [#allocation2], %s223
          %226 = vsyncadd %s221, 0
          %s227 = smul.addr %s19, 8
          %s228 = scalar_lea.hbm %s0, %s227
          %s230 = sshll.u32 %s228, 4
          %s231 = int_to_ptr.hbm [resolvable:$true] %s230
          %s232 = sshll.u32 %s224, 4
          %s233 = int_to_ptr.vmem [resolvable:$true] %s232
          %235 = dma.hbm_to_vmem [thread:$0]  %s231, 128, %s233, %s221
        $region36: #{tpu_custom_call.1} parent=31 // pred_fallthru
          _
      $region32: #{tpu_custom_call.1} parent=5 // pred_fallthru
        _
      %p236 = scmp.le.s32.totalorder 1, %s19
      %p237 = scmp.lt.s32.totalorder %s19, 3
      %p238 = pnand %p236, %p237
      %p239 = pneg %p238
      // Predicated region
      $region37: #{tpu_custom_call.1} parent=5 // pred_check
        _
      $region38: #{tpu_custom_call.1} parent=5 // pred_check_branch
        %241 = sbr.rel (%p238) target = $region40
      $region39: #{tpu_custom_call.1} parent=5 // pred_region
        %s242 = ssub.s32 %s19, 1
        %s243 = sand.u32 %s32, 1
        %s244 = scalar_lea.sflag [#allocation3], %s243
        %s245 = sand.u32 %s32, 1
        %s246 = smul.addr %s245, 8
        %s247 = scalar_lea.vmem [#allocation2], %s246
        // Predicated region
        $region41: #{tpu_custom_call.1} parent=39 // pred_check
          %p248 = pneg %p45
        $region42: #{tpu_custom_call.1} parent=39 // pred_check_branch
          %250 = sbr.rel (%p248) target = $region44
        $region43: #{tpu_custom_call.1} parent=39 // pred_region
          %252 = dma.done %s244, 128
        $region44: #{tpu_custom_call.1} parent=39 // pred_fallthru
          _
        // Predicated region
        $region45: #{tpu_custom_call.1} parent=39 // pred_check
          %p253 = pneg %p66
        $region46: #{tpu_custom_call.1} parent=39 // pred_check_branch
          %255 = sbr.rel (%p253) target = $region48
        $region47: #{tpu_custom_call.1} parent=39 // pred_region
          %257 = dma.done [#allocation6], 128
        $region48: #{tpu_custom_call.1} parent=39 // pred_fallthru
          _
        // Predicated region
        $region49: #{tpu_custom_call.1} parent=39 // pred_check
          %p258 = pneg %p108
        $region50: #{tpu_custom_call.1} parent=39 // pred_check_branch
          %260 = sbr.rel (%p258) target = $region52
        $region51: #{tpu_custom_call.1} parent=39 // pred_region
          %262 = dma.done [#allocation6], 4096
        $region52: #{tpu_custom_call.1} parent=39 // pred_fallthru
          _
        // Predicated region
        $region53: #{tpu_custom_call.1} parent=39 // pred_check
          %p263 = pneg %p129
        $region54: #{tpu_custom_call.1} parent=39 // pred_check_branch
          %265 = sbr.rel (%p263) target = $region56
        $region55: #{tpu_custom_call.1} parent=39 // pred_region
          %267 = dma.done [#allocation9], 64
        $region56: #{tpu_custom_call.1} parent=39 // pred_fallthru
          _
        %s268 = sand.u32 %s32, 1
        %s269 = scalar_lea.sflag [#allocation3], %s268
        %s270 = sand.u32 %s32, 1
        %s271 = smul.addr %s270, 8
        %s272 = scalar_lea.vmem [#allocation2], %s271
        %p273 = pneg %p45
        %p274 = pneg %p42
        %p275 = pneg %p66
        %p276 = pneg %p63
        %p277 = pneg %p87
        %p278 = pneg %p84
        %p279 = pneg %p108
        %p280 = pneg %p105
        %p281 = pneg %p129
        %p282 = pneg %p126
        %p283 = pneg %p155
        %p284 = pneg %p152
        %s285 = sand.u32 %s142, 1
        %s286 = scalar_lea.sflag [#allocation4], %s285
        %s287 = sand.u32 %s142, 1
        %s288 = smul.addr %s287, 16
        %s289 = scalar_lea.vmem [#allocation10], %s288
        %v291 = vld [vmem:[%s247] sm:$0xff]
        %v292 = vpack.c.bf16 %v291, %v291
        %v293 = vld [vmem:[#allocation5] sm:$0xf]
        %v294 = vld [vmem:[#allocation5 + $0x4] sm:$0xf]
        %v295 = vld [vmem:[%s2] sm:$0x1]
        %v297 = vperm.slane %v295, 0
        %v301 = vunpack.c.l.b16 %v293
        %v302 = vunpack.c.l.b16 %v294
        %v303 = vpack.c.b16 %v302, %v301
        %vm305 = vcmask 130048
        %v307 = vsel %vm305, %v292, 0
        %309 = vmatpush.bf16.msra.mxu0 0
        %310 = vmatpush.bf16.msra.mxu0 0
        %311 = vmatpush.bf16.msra.mxu0 0
        %312 = vmatpush.bf16.msra.mxu0 0
        %313 = vmatpush.bf16.msra.mxu0 0
        %314 = vmatpush.bf16.msra.mxu0 0
        %315 = vmatpush.bf16.msra.mxu0 0
        %316 = vmatpush.bf16.msra.mxu0 %v303
        %317 = vmatmul.bf16.gmra.mxu0 %v307
        %v318 = vpop.f32.mrf.mxu0
        %v319 = vadd.f32 %v297, %v318
        %v320 = vpop.f32.mrf.mxu0
        %321 = vdwg.mxu0
        %v322 = vtanh.pop %v319
        %v323 = vpack.c.bf16 %v322, %v322
        %v324 = vld [vmem:[#allocation7] sm:$0xff]
        %v325 = vld [vmem:[#allocation7 + $0x8] sm:$0xff]
        %v326 = vld [vmem:[#allocation7 + $0x10] sm:$0xff]
        %v327 = vld [vmem:[#allocation7 + $0x18] sm:$0xff]
        %v328 = vld [vmem:[#allocation7 + $0x20] sm:$0xff]
        %v329 = vld [vmem:[#allocation7 + $0x28] sm:$0xff]
        %v330 = vld [vmem:[#allocation7 + $0x30] sm:$0xff]
        %v331 = vld [vmem:[#allocation7 + $0x38] sm:$0xff]
        %v332 = vld [vmem:[#allocation7 + $0x40] sm:$0xff]
        %v333 = vld [vmem:[#allocation7 + $0x48] sm:$0xff]
        %v334 = vld [vmem:[#allocation7 + $0x50] sm:$0xff]
        %v335 = vld [vmem:[#allocation7 + $0x58] sm:$0xff]
        %v336 = vld [vmem:[#allocation7 + $0x60] sm:$0xff]
        %v337 = vld [vmem:[#allocation7 + $0x68] sm:$0xff]
        %v338 = vld [vmem:[#allocation7 + $0x70] sm:$0xff]
        %v339 = vld [vmem:[#allocation7 + $0x78] sm:$0xff]
        %v340 = vld [vmem:[#allocation7 + $0x80] sm:$0xff]
        %v341 = vld [vmem:[#allocation7 + $0x88] sm:$0xff]
        %v342 = vld [vmem:[#allocation7 + $0x90] sm:$0xff]
        %v343 = vld [vmem:[#allocation7 + $0x98] sm:$0xff]
        %v344 = vld [vmem:[#allocation7 + $0xa0] sm:$0xff]
        %v345 = vld [vmem:[#allocation7 + $0xa8] sm:$0xff]
        %v346 = vld [vmem:[#allocation7 + $0xb0] sm:$0xff]
        %v347 = vld [vmem:[#allocation7 + $0xb8] sm:$0xff]
        %v348 = vld [vmem:[#allocation7 + $0xc0] sm:$0xff]
        %v349 = vld [vmem:[#allocation7 + $0xc8] sm:$0xff]
        %v350 = vld [vmem:[#allocation7 + $0xd0] sm:$0xff]
        %v351 = vld [vmem:[#allocation7 + $0xd8] sm:$0xff]
        %v352 = vld [vmem:[#allocation7 + $0xe0] sm:$0xff]
        %v353 = vld [vmem:[#allocation7 + $0xe8] sm:$0xff]
        %v354 = vld [vmem:[#allocation7 + $0xf0] sm:$0xff]
        %v355 = vld [vmem:[#allocation7 + $0xf8] sm:$0xff]
        %v356 = vld [vmem:[#allocation8] sm:$0xf]
        %v358 = vperm.slane %v356, 0
        %v359 = vperm.slane %v356, 1
        %v360 = vperm.slane %v356, 2
        %v361 = vperm.slane %v356, 3
        %v398 = vunpack.c.l.b16 %v324
        %v399 = vunpack.c.h.b16 %v324
        %v400 = vunpack.c.l.b16 %v325
        %v401 = vunpack.c.h.b16 %v325
        %v402 = vunpack.c.l.b16 %v326
        %v403 = vunpack.c.h.b16 %v326
        %v404 = vunpack.c.l.b16 %v327
        %v405 = vunpack.c.h.b16 %v327
        %v406 = vunpack.c.l.b16 %v328
        %v407 = vunpack.c.h.b16 %v328
        %v408 = vunpack.c.l.b16 %v329
        %v409 = vunpack.c.h.b16 %v329
        %v410 = vunpack.c.l.b16 %v330
        %v411 = vunpack.c.h.b16 %v330
        %v412 = vunpack.c.l.b16 %v331
        %v413 = vunpack.c.h.b16 %v331
        %v414 = vunpack.c.l.b16 %v332
        %v415 = vunpack.c.h.b16 %v332
        %v416 = vunpack.c.l.b16 %v333
        %v417 = vunpack.c.h.b16 %v333
        %v418 = vunpack.c.l.b16 %v334
        %v419 = vunpack.c.h.b16 %v334
        %v420 = vunpack.c.l.b16 %v335
        %v421 = vunpack.c.h.b16 %v335
        %v422 = vunpack.c.l.b16 %v336
        %v423 = vunpack.c.h.b16 %v336
        %v424 = vunpack.c.l.b16 %v337
        %v425 = vunpack.c.h.b16 %v337
        %v426 = vunpack.c.l.b16 %v338
        %v427 = vunpack.c.h.b16 %v338
        %v428 = vunpack.c.l.b16 %v339
        %v429 = vunpack.c.h.b16 %v339
        %v430 = vunpack.c.l.b16 %v340
        %v431 = vunpack.c.h.b16 %v340
        %v432 = vunpack.c.l.b16 %v341
        %v433 = vunpack.c.h.b16 %v341
        %v434 = vunpack.c.l.b16 %v342
        %v435 = vunpack.c.h.b16 %v342
        %v436 = vunpack.c.l.b16 %v343
        %v437 = vunpack.c.h.b16 %v343
        %v438 = vunpack.c.l.b16 %v344
        %v439 = vunpack.c.h.b16 %v344
        %v440 = vunpack.c.l.b16 %v345
        %v441 = vunpack.c.h.b16 %v345
        %v442 = vunpack.c.l.b16 %v346
        %v443 = vunpack.c.h.b16 %v346
        %v444 = vunpack.c.l.b16 %v347
        %v445 = vunpack.c.h.b16 %v347
        %v446 = vunpack.c.l.b16 %v348
        %v447 = vunpack.c.h.b16 %v348
        %v448 = vunpack.c.l.b16 %v349
        %v449 = vunpack.c.h.b16 %v349
        %v450 = vunpack.c.l.b16 %v350
        %v451 = vunpack.c.h.b16 %v350
        %v452 = vunpack.c.l.b16 %v351
        %v453 = vunpack.c.h.b16 %v351
        %v454 = vunpack.c.l.b16 %v352
        %v455 = vunpack.c.h.b16 %v352
        %v456 = vunpack.c.l.b16 %v353
        %v457 = vunpack.c.h.b16 %v353
        %v458 = vunpack.c.l.b16 %v354
        %v459 = vunpack.c.h.b16 %v354
        %v460 = vunpack.c.l.b16 %v355
        %v461 = vunpack.c.h.b16 %v355
        %v462 = vpack.c.b16 %v402, %v398
        %v463 = vpack.c.b16 %v403, %v399
        %v464 = vpack.c.b16 %v404, %v400
        %v465 = vpack.c.b16 %v405, %v401
        %v466 = vpack.c.b16 %v410, %v406
        %v467 = vpack.c.b16 %v411, %v407
        %v468 = vpack.c.b16 %v412, %v408
        %v469 = vpack.c.b16 %v413, %v409
        %v470 = vpack.c.b16 %v418, %v414
        %v471 = vpack.c.b16 %v419, %v415
        %v472 = vpack.c.b16 %v420, %v416
        %v473 = vpack.c.b16 %v421, %v417
        %v474 = vpack.c.b16 %v426, %v422
        %v475 = vpack.c.b16 %v427, %v423
        %v476 = vpack.c.b16 %v428, %v424
        %v477 = vpack.c.b16 %v429, %v425
        %v478 = vpack.c.b16 %v434, %v430
        %v479 = vpack.c.b16 %v435, %v431
        %v480 = vpack.c.b16 %v436, %v432
        %v481 = vpack.c.b16 %v437, %v433
        %v482 = vpack.c.b16 %v442, %v438
        %v483 = vpack.c.b16 %v443, %v439
        %v484 = vpack.c.b16 %v444, %v440
        %v485 = vpack.c.b16 %v445, %v441
        %v486 = vpack.c.b16 %v450, %v446
        %v487 = vpack.c.b16 %v451, %v447
        %v488 = vpack.c.b16 %v452, %v448
        %v489 = vpack.c.b16 %v453, %v449
        %v490 = vpack.c.b16 %v458, %v454
        %v491 = vpack.c.b16 %v459, %v455
        %v492 = vpack.c.b16 %v460, %v456
        %v493 = vpack.c.b16 %v461, %v457
        %526 = vmatpush.bf16.msra.mxu0 %v490
        %527 = vmatpush.bf16.msra.mxu0 %v486
        %528 = vmatpush.bf16.msra.mxu0 %v482
        %529 = vmatpush.bf16.msra.mxu0 %v478
        %530 = vmatpush.bf16.msra.mxu0 %v474
        %531 = vmatpush.bf16.msra.mxu0 %v470
        %532 = vmatpush.bf16.msra.mxu0 %v466
        %533 = vmatpush.bf16.msra.mxu0 %v462
        %534 = vmatmul.bf16.gmra.mxu0 %v323
        %v535 = vpop.f32.mrf.mxu0
        %v536 = vadd.f32 %v358, %v535
        %v537 = vpop.f32.mrf.mxu0
        %538 = vdwg.mxu0
        %539 = vmatpush.bf16.msra.mxu0 %v491
        %540 = vmatpush.bf16.msra.mxu0 %v487
        %541 = vmatpush.bf16.msra.mxu0 %v483
        %542 = vmatpush.bf16.msra.mxu0 %v479
        %543 = vmatpush.bf16.msra.mxu0 %v475
        %544 = vmatpush.bf16.msra.mxu0 %v471
        %545 = vmatpush.bf16.msra.mxu0 %v467
        %546 = vmatpush.bf16.msra.mxu0 %v463
        %547 = vmatmul.bf16.gmra.mxu0 %v323
        %v548 = vpop.f32.mrf.mxu0
        %v549 = vadd.f32 %v359, %v548
        %v550 = vpop.f32.mrf.mxu0
        %551 = vdwg.mxu0
        %552 = vmatpush.bf16.msra.mxu0 %v492
        %553 = vmatpush.bf16.msra.mxu0 %v488
        %554 = vmatpush.bf16.msra.mxu0 %v484
        %555 = vmatpush.bf16.msra.mxu0 %v480
        %556 = vmatpush.bf16.msra.mxu0 %v476
        %557 = vmatpush.bf16.msra.mxu0 %v472
        %558 = vmatpush.bf16.msra.mxu0 %v468
        %559 = vmatpush.bf16.msra.mxu0 %v464
        %560 = vmatmul.bf16.gmra.mxu0 %v323
        %v561 = vpop.f32.mrf.mxu0
        %v562 = vadd.f32 %v360, %v561
        %v563 = vpop.f32.mrf.mxu0
        %564 = vdwg.mxu0
        %565 = vmatpush.bf16.msra.mxu0 %v493
        %566 = vmatpush.bf16.msra.mxu0 %v489
        %567 = vmatpush.bf16.msra.mxu0 %v485
        %568 = vmatpush.bf16.msra.mxu0 %v481
        %569 = vmatpush.bf16.msra.mxu0 %v477
        %570 = vmatpush.bf16.msra.mxu0 %v473
        %571 = vmatpush.bf16.msra.mxu0 %v469
        %572 = vmatpush.bf16.msra.mxu0 %v465
        %573 = vmatmul.bf16.gmra.mxu0 %v323
        %v574 = vpop.f32.mrf.mxu0
        %v575 = vadd.f32 %v361, %v574
        %v576 = vpop.f32.mrf.mxu0
        %577 = vdwg.mxu0
        %v578 = vpack.c.bf16 %v549, %v536
        %v579 = vpack.c.bf16 %v575, %v562
        %580 = vst [vmem:[%s289] sm:$0xff] %v578
        %581 = vst [vmem:[%s289 + $0x8] sm:$0xff] %v579
        %s582 = sand.u32 %s142, 1
        %s583 = scalar_lea.sflag [#allocation4], %s582
        %s584 = sand.u32 %s142, 1
        %s585 = smul.addr %s584, 16
        %s586 = scalar_lea.vmem [#allocation10], %s585
        // Predicated region
        $region57: #{tpu_custom_call.1} parent=39 // pred_check
          %p587 = pneg %p152
        $region58: #{tpu_custom_call.1} parent=39 // pred_check_branch
          %589 = sbr.rel (%p587) target = $region60
        $region59: #{tpu_custom_call.1} parent=39 // pred_region
          %591 = vsyncadd %s583, 0
          %s592 = smul.addr %s24, 4
          %s593 = smul.addr %s592, 4
          %s594 = scalar_lea.hbm %s5, %s593
          %s596 = sshll.u32 %s586, 4
          %s597 = int_to_ptr.vmem [resolvable:$true] %s596
          %s598 = sshll.u32 %s594, 4
          %s599 = int_to_ptr.hbm [resolvable:$true] %s598
          %601 = dma.vmem_to_hbm [thread:$0]  %s597, 256, %s599, %s583
        $region60: #{tpu_custom_call.1} parent=39 // pred_fallthru
          _
      $region40: #{tpu_custom_call.1} parent=5 // pred_fallthru
        _
      %p602 = scmp.le.s32.totalorder 2, %s19
      // Predicated region
      $region61: #{tpu_custom_call.1} parent=5 // pred_check
        %p603 = pneg %p602
      $region62: #{tpu_custom_call.1} parent=5 // pred_check_branch
        %605 = sbr.rel (%p603) target = $region64
      $region63: #{tpu_custom_call.1} parent=5 // pred_region
        %s606 = ssub.s32 %s19, 2
        // Predicated region
        $region65: #{tpu_custom_call.1} parent=63 // pred_check
          %p607 = pneg %p158
        $region66: #{tpu_custom_call.1} parent=63 // pred_check_branch
          %609 = sbr.rel (%p607) target = $region68
        $region67: #{tpu_custom_call.1} parent=63 // pred_region
          %s610 = sand.u32 %s143, 1
          %s611 = scalar_lea.sflag [#allocation4], %s610
          %s612 = sand.u32 %s143, 1
          %s613 = smul.addr %s612, 16
          %s614 = scalar_lea.vmem [#allocation10], %s613
          %616 = dma.done %s611, 256
        $region68: #{tpu_custom_call.1} parent=63 // pred_fallthru
          _
      $region64: #{tpu_custom_call.1} parent=5 // pred_fallthru
        _
    $region6: #{tpu_custom_call.1} parent=1 // loop_footer
      %s23 = sadd.s32 1, %s19
    $region7: #{tpu_custom_call.1} parent=1 // loop_footer_branch
      %18 = sbr.rel target = $region3
    $region8: #{tpu_custom_call.1} parent=1 // loop_exit
      _
    %617 = vsyncpa [#allocation3], 1
    %s618 = scalar_lea.sflag [#allocation3], 1
    %619 = vsyncpa %s618, 1
    %620 = vsyncpa [#allocation6], 1
    %621 = vsyncpa [#allocation9], 1
    %622 = vsyncpa [#allocation4], 1
    %s623 = scalar_lea.sflag [#allocation4], 1
    %624 = vsyncpa %s623, 1

</llo_original>
